<compile_context>
chip_gen: v7x
topology: tpu7x:2x2x1
jax: 0.10.0
libtpu: 0.0.40
codegen_flags: <defaults>
</compile_context>

<pallas_src>
import math

import jax
import jax.numpy as jnp
from jax.experimental import pallas as pl
from jax.experimental.pallas import tpu as pltpu


LANE = 128      # lane-dense last dim target for the padded embed axis
SUBLANE = 8     # second-to-last block dim multiple


def _round_up(x, m):
    return ((x + m - 1) // m) * m


def _vmem_capacity_bytes():
    """Physical VMEM of the current generation (128 MiB v5e/v6e, 64 MiB v7x)."""
    try:
        cap = int(pltpu.get_tpu_info().vmem_capacity_bytes)
        if cap > 0:
            return cap
    except Exception:
        pass
    return 64 * 1024 * 1024   # conservative fallback (v7x per-TensorCore)


# -----------------------------------------------------------------------------
# Kernel: two GEMMs + two bias adds over one batch tile.
# -----------------------------------------------------------------------------
def _fused_affine_kernel(expr_ref, w1_ref, b1_ref, w2_ref, b2_ref, out_ref):
    x = expr_ref[...].astype(w1_ref.dtype)                             # in-kernel cast (VPU)
    h = jnp.dot(x, w1_ref[...], preferred_element_type=jnp.float32)    # MXU, f32 acc
    h = h + b1_ref[...]                                                 # f32 bias
    h = h.astype(w2_ref.dtype)                                          # narrow activation
    o = jnp.dot(h, w2_ref[...], preferred_element_type=jnp.float32)    # MXU, f32 acc
    out_ref[...] = (o + b2_ref[...]).astype(out_ref.dtype)             # bf16 store


# -----------------------------------------------------------------------------
# One-time parameter prep: fold the affine chain; pad only the embed axis
# (the gene axis stays un-padded so expr/out need no runtime pad/slice pass).
# -----------------------------------------------------------------------------
def prepare_fused_params(raw, param_dtype=jnp.bfloat16):
    G = raw["Wv_t"].shape[1]
    E = raw["Wv_t"].shape[0]

    # value_transform -> in_proj(v) -> out_proj folded into one affine map (f32).
    w1 = raw["Wv_t"].T @ raw["Wiv"].T @ raw["Wo"].T                    # (G, E)
    b1 = (raw["bv_t"] @ raw["Wiv"].T @ raw["Wo"].T
          + raw["biv"] @ raw["Wo"].T + raw["bo"])                      # (E,)
    w2 = raw["Wl"].T                                                   # (E, G)
    b2 = raw["bl"]                                                     # (G,)

    Ep = _round_up(E, LANE)                                            # lane-dense hidden dim
    w1p = jnp.pad(w1, ((0, 0), (0, Ep - E))).astype(param_dtype)       # (G, Ep)
    b1p = jnp.pad(b1, (0, Ep - E)).astype(jnp.float32)[None, :]        # (1, Ep)
    w2p = jnp.pad(w2, ((0, Ep - E), (0, 0))).astype(param_dtype)       # (Ep, G)
    b2p = b2.astype(jnp.float32)[None, :]                              # (1, G)

    return {
        "w1": w1p, "b1": b1p, "w2": w2p, "b2": b2p,
        "n_genes": G, "embed_dim": E, "Ep": Ep, "param_dtype": param_dtype,
    }


def _choose_tile_b(B, G, Ep, expr_isz, w_isz, out_isz, vmem_budget):
    # Weights/biases counted ONCE: constant index_map + Buffered(1).
    weight_bytes = (G * Ep + Ep * G) * w_isz + (Ep + G) * 4
    tile = max(SUBLANE, min(_round_up(B, SUBLANE), 1024))
    while tile > SUBLANE:
        act = 2 * tile * G * expr_isz            # expr tiles (double-buffered)
        act += 2 * tile * G * out_isz            # output tiles (double-buffered)
        act += tile * Ep * (4 + w_isz)           # f32 hidden + narrowed copy
        if weight_bytes + act + (2 << 20) <= vmem_budget:
            break
        tile = max(SUBLANE, _round_up(tile // 2, SUBLANE))
    # Keep >= 2 grid steps (>= 4 when batch allows) so the "parallel" batch axis
    # actually shards across TensorCores (v7x) and pipelines DMA with compute.
    if B > SUBLANE:
        target_steps = 4 if B >= 4 * SUBLANE else 2
        cap = max(SUBLANE, _round_up(-(-B // target_steps), SUBLANE))
        tile = min(tile, cap)
    return tile


def cross_attention_pallas(comp, expr, fused):
    """Forward pass of CrossAttention.

    `comp` mirrors the PyTorch signature but is mathematically unused: with a
    length-1 key axis the softmax weights are identically 1.0, so the query
    path (driven by comp) never reaches the output.
    """
    del comp
    B, G_in = expr.shape
    G = fused["n_genes"]
    assert G_in == G, (G_in, G)
    Ep = fused["Ep"]
    pdt = fused["param_dtype"]
    out_dtype = pdt                      # bf16 output: halves write bandwidth

    w_isz = jnp.dtype(pdt).itemsize
    e_isz = jnp.dtype(expr.dtype).itemsize
    o_isz = jnp.dtype(out_dtype).itemsize

    cap = _vmem_capacity_bytes()
    headroom = 8 * 1024 * 1024           # never run the scoped limit to the wall
    vmem_budget = max(32 * 1024 * 1024, cap - headroom)

    tile_b = _choose_tile_b(B, G, Ep, e_isz, w_isz, o_isz, vmem_budget)
    grid = (pl.cdiv(B, tile_b),)

    weight_bytes = (G * Ep + Ep * G) * w_isz + (Ep + G) * 4
    act_bytes = 2 * tile_b * G * e_isz + 2 * tile_b * G * o_isz + tile_b * Ep * (4 + w_isz)
    vmem_limit = int(min(max(weight_bytes + act_bytes + (4 << 20), 32 * 1024 * 1024),
                         cap - headroom))

    cost = pl.CostEstimate(
        flops=4 * B * G * Ep,                                    # two GEMMs
        transcendentals=0,
        bytes_accessed=B * G * e_isz + weight_bytes + B * G * o_isz,
    )

    def _run(single_buffer_weights):
        wmode = ({"pipeline_mode": pl.Buffered(1)}
                 if single_buffer_weights else {})
        return pl.pallas_call(
            _fused_affine_kernel,
            out_shape=jax.ShapeDtypeStruct((B, G), out_dtype),
            grid=grid,
            in_specs=[
                pl.BlockSpec((tile_b, G), lambda i: (i, 0)),           # expr: batch-tiled
                pl.BlockSpec((G, Ep), lambda i: (0, 0), **wmode),      # W1: VMEM-resident
                pl.BlockSpec((1, Ep), lambda i: (0, 0), **wmode),      # b1
                pl.BlockSpec((Ep, G), lambda i: (0, 0), **wmode),      # W2: VMEM-resident
                pl.BlockSpec((1, G), lambda i: (0, 0), **wmode),       # b2
            ],
            out_specs=pl.BlockSpec((tile_b, G), lambda i: (i, 0)),
            compiler_params=pltpu.CompilerParams(
                dimension_semantics=("parallel",),
                vmem_limit_bytes=vmem_limit,
            ),
            cost_estimate=cost,
        )(expr, fused["w1"], fused["b1"], fused["w2"], fused["b2"])

    try:
        return _run(True)
    except Exception:
        # Fallback if this Pallas build rejects Buffered(1) on constant specs.
        return _run(False)


# -----------------------------------------------------------------------------
# Deterministic synthetic parameters (PyTorch Linear convention W:(out,in)).
# -----------------------------------------------------------------------------
def make_params(key, n_classes, n_genes, embed_dim):
    ks = jax.random.split(key, 16)
    def w(k, o, i): return jax.random.normal(k, (o, i), jnp.float32) * 0.05
    def b(k, o): return jax.random.normal(k, (o,), jnp.float32) * 0.01
    return {
        "Wq_t": w(ks[0], embed_dim, n_classes), "bq_t": b(ks[1], embed_dim),
        "Wk_t": w(ks[2], embed_dim, n_genes),   "bk_t": b(ks[3], embed_dim),
        "Wv_t": w(ks[4], embed_dim, n_genes),   "bv_t": b(ks[5], embed_dim),
        "Wiq":  w(ks[6], embed_dim, embed_dim), "biq":  b(ks[7], embed_dim),
        "Wik":  w(ks[8], embed_dim, embed_dim), "bik":  b(ks[9], embed_dim),
        "Wiv":  w(ks[10], embed_dim, embed_dim), "biv": b(ks[11], embed_dim),
        "Wo":   w(ks[12], embed_dim, embed_dim), "bo":  b(ks[13], embed_dim),
        "Wl":   w(ks[14], n_genes, embed_dim),   "bl":  b(ks[15], n_genes),
    }


def reference_jax(comp, expr, raw, num_heads):
    """Pure-JAX f32 mirror of the full (unfused) PyTorch forward pass."""
    B = comp.shape[0]
    E = raw["Wq_t"].shape[0]
    hd = E // num_heads
    c = comp[None]   # (1, B, n_classes)
    x = expr[None]   # (1, B, n_genes)
    query = c @ raw["Wq_t"].T + raw["bq_t"]
    key = x @ raw["Wk_t"].T + raw["bk_t"]
    value = x @ raw["Wv_t"].T + raw["bv_t"]
    q = query @ raw["Wiq"].T + raw["biq"]
    k = key @ raw["Wik"].T + raw["bik"]
    v = value @ raw["Wiv"].T + raw["biv"]
    qh = q.reshape(1, B, num_heads, hd)
    kh = k.reshape(1, B, num_heads, hd)
    vh = v.reshape(1, B, num_heads, hd)
    scores = jnp.einsum("lbhd,sbhd->bhls", qh, kh) / math.sqrt(hd)  # (B,H,1,1)
    attnw = jax.nn.softmax(scores, axis=-1)
    ctx = jnp.einsum("bhls,sbhd->lbhd", attnw, vh).reshape(1, B, E)
    out = ctx @ raw["Wo"].T + raw["bo"]
    out = out[0] @ raw["Wl"].T + raw["bl"]
    return out


if __name__ == "__main__":
    B, n_classes, n_genes, embed_dim, num_heads = 16, 8, 32, 32, 8
    root = jax.random.PRNGKey(0)
    k_comp, k_expr, k_params = jax.random.split(root, 3)
    comp = jax.random.normal(k_comp, (B, n_classes), jnp.float32)
    expr = jax.random.normal(k_expr, (B, n_genes), jnp.float32)
    raw = make_params(k_params, n_classes, n_genes, embed_dim)

    fused = prepare_fused_params(raw, param_dtype=jnp.bfloat16)
    out = cross_attention_pallas(comp, expr, fused)
    out = jax.block_until_ready(out)

    ref = reference_jax(comp, expr, raw, num_heads)
    assert out.shape == (B, n_genes), out.shape
    out_f32 = out.astype(jnp.float32)
    max_err = float(jnp.max(jnp.abs(out_f32 - ref)))
    assert jnp.allclose(out_f32, ref, rtol=2e-2, atol=3e-3), max_err
    print("KERNEL_OK")
</pallas_src>

<mosaic_0001>
module attributes {stable_mosaic.version = 11 : i64} {
  func.func @_fused_affine_kernel(%arg0: i32, %arg1: memref<8x32xf32, #tpu.memory_space<vmem>>, %arg2: memref<32x128xbf16, #tpu.memory_space<vmem>>, %arg3: memref<1x128xf32, #tpu.memory_space<vmem>>, %arg4: memref<128x32xbf16, #tpu.memory_space<vmem>>, %arg5: memref<1x32xf32, #tpu.memory_space<vmem>>, %arg6: memref<8x32xbf16, #tpu.memory_space<vmem>>) attributes {dimension_semantics = [#tpu.dimension_semantics<parallel>], iteration_bounds = array<i64: 2>, scalar_prefetch = 0 : i64, scratch_operands = 0 : i64, tpu.core_type = #tpu.core_type<tc>, window_params = [{transform_indices = @transform_0, window_bounds = array<i64: 8, 32>}, {pipeline_mode = #tpu.pipeline_mode<synchronous>, transform_indices = @transform_1, window_bounds = array<i64: 32, 128>}, {pipeline_mode = #tpu.pipeline_mode<synchronous>, transform_indices = @transform_2, window_bounds = array<i64: 1, 128>}, {pipeline_mode = #tpu.pipeline_mode<synchronous>, transform_indices = @transform_3, window_bounds = array<i64: 128, 32>}, {pipeline_mode = #tpu.pipeline_mode<synchronous>, transform_indices = @transform_4, window_bounds = array<i64: 1, 32>}, {transform_indices = @transform_5, window_bounds = array<i64: 8, 32>}]} {
    %c0 = arith.constant 0 : index
    %c0_0 = arith.constant 0 : index
    %0 = vector.load %arg1[%c0, %c0_0] : memref<8x32xf32, #tpu.memory_space<vmem>>, vector<8x32xf32>
    %1 = arith.truncf %0 : vector<8x32xf32> to vector<8x32xbf16>
    %c0_1 = arith.constant 0 : index
    %c0_2 = arith.constant 0 : index
    %2 = vector.load %arg2[%c0_1, %c0_2] : memref<32x128xbf16, #tpu.memory_space<vmem>>, vector<32x128xbf16>
    %cst = arith.constant dense<0.000000e+00> : vector<8x128xf32>
    %3 = tpu.matmul %1, %2, %cst {dimension_numbers = #tpu.dot_dimension_numbers<[1], [0], [0], [1], [0, 0, 1, 1], [], []>} : vector<8x32xbf16>, vector<32x128xbf16>, vector<8x128xf32> -> vector<8x128xf32>
    %c0_3 = arith.constant 0 : index
    %c0_4 = arith.constant 0 : index
    %4 = vector.load %arg3[%c0_3, %c0_4] : memref<1x128xf32, #tpu.memory_space<vmem>>, vector<1x128xf32>
    %5 = vector.broadcast %4 : vector<1x128xf32> to vector<8x128xf32>
    %6 = arith.addf %3, %5 : vector<8x128xf32>
    %7 = arith.truncf %6 : vector<8x128xf32> to vector<8x128xbf16>
    %c0_5 = arith.constant 0 : index
    %c0_6 = arith.constant 0 : index
    %8 = vector.load %arg4[%c0_5, %c0_6] : memref<128x32xbf16, #tpu.memory_space<vmem>>, vector<128x32xbf16>
    %cst_7 = arith.constant dense<0.000000e+00> : vector<8x32xf32>
    %9 = tpu.matmul %7, %8, %cst_7 {dimension_numbers = #tpu.dot_dimension_numbers<[1], [0], [0], [1], [0, 0, 1, 1], [], []>} : vector<8x128xbf16>, vector<128x32xbf16>, vector<8x32xf32> -> vector<8x32xf32>
    %c0_8 = arith.constant 0 : index
    %c0_9 = arith.constant 0 : index
    %10 = vector.load %arg5[%c0_8, %c0_9] : memref<1x32xf32, #tpu.memory_space<vmem>>, vector<1x32xf32>
    %11 = vector.broadcast %10 : vector<1x32xf32> to vector<8x32xf32>
    %12 = arith.addf %9, %11 : vector<8x32xf32>
    %13 = arith.truncf %12 : vector<8x32xf32> to vector<8x32xbf16>
    %c0_10 = arith.constant 0 : index
    %c0_11 = arith.constant 0 : index
    %14 = vector.load %arg6[%c0_10, %c0_11] : memref<8x32xbf16, #tpu.memory_space<vmem>>, vector<8x32xbf16>
    tpu.vector_store %arg6[%c0_10, %c0_11], %13 {strides = array<i32>} : memref<8x32xbf16, #tpu.memory_space<vmem>>, vector<8x32xbf16>,
    return
  }
  func.func @transform_0(%arg0: i32) -> (i32, i32) {
    %c0_i32 = arith.constant 0 : i32
    %c0_i32_0 = arith.constant 0 : i32
    return %arg0, %c0_i32 : i32, i32
  }
  func.func @transform_1(%arg0: i32) -> (i32, i32) {
    %c0_i32 = arith.constant 0 : i32
    %c0_i32_0 = arith.constant 0 : i32
    %c0_i32_1 = arith.constant 0 : i32
    return %c0_i32, %c0_i32_0 : i32, i32
  }
  func.func @transform_2(%arg0: i32) -> (i32, i32) {
    %c0_i32 = arith.constant 0 : i32
    %c0_i32_0 = arith.constant 0 : i32
    %c0_i32_1 = arith.constant 0 : i32
    return %c0_i32, %c0_i32_0 : i32, i32
  }
  func.func @transform_3(%arg0: i32) -> (i32, i32) {
    %c0_i32 = arith.constant 0 : i32
    %c0_i32_0 = arith.constant 0 : i32
    %c0_i32_1 = arith.constant 0 : i32
    return %c0_i32, %c0_i32_0 : i32, i32
  }
  func.func @transform_4(%arg0: i32) -> (i32, i32) {
    %c0_i32 = arith.constant 0 : i32
    %c0_i32_0 = arith.constant 0 : i32
    %c0_i32_1 = arith.constant 0 : i32
    return %c0_i32, %c0_i32_0 : i32, i32
  }
  func.func @transform_5(%arg0: i32) -> (i32, i32) {
    %c0_i32 = arith.constant 0 : i32
    %c0_i32_0 = arith.constant 0 : i32
    return %arg0, %c0_i32 : i32, i32
  }
}

module attributes {stable_mosaic.version = 11 : i64} {
  func.func @_fused_affine_kernel(%arg0: i32, %arg1: memref<8x32xf32, #tpu.memory_space<vmem>>, %arg2: memref<32x128xbf16, #tpu.memory_space<vmem>>, %arg3: memref<1x128xf32, #tpu.memory_space<vmem>>, %arg4: memref<128x32xbf16, #tpu.memory_space<vmem>>, %arg5: memref<1x32xf32, #tpu.memory_space<vmem>>, %arg6: memref<8x32xbf16, #tpu.memory_space<vmem>>) attributes {dimension_semantics = [#tpu.dimension_semantics<parallel>], iteration_bounds = array<i64: 2>, scalar_prefetch = 0 : i64, scratch_operands = 0 : i64, tpu.core_type = #tpu.core_type<tc>, window_params = [{transform_indices = @transform_0, window_bounds = array<i64: 8, 32>}, {pipeline_mode = #tpu.pipeline_mode<synchronous>, transform_indices = @transform_1, window_bounds = array<i64: 32, 128>}, {pipeline_mode = #tpu.pipeline_mode<synchronous>, transform_indices = @transform_2, window_bounds = array<i64: 1, 128>}, {pipeline_mode = #tpu.pipeline_mode<synchronous>, transform_indices = @transform_3, window_bounds = array<i64: 128, 32>}, {pipeline_mode = #tpu.pipeline_mode<synchronous>, transform_indices = @transform_4, window_bounds = array<i64: 1, 32>}, {transform_indices = @transform_5, window_bounds = array<i64: 8, 32>}]} {
    %c0 = arith.constant 0 : index
    %c0_0 = arith.constant 0 : index
    %0 = vector.load %arg1[%c0, %c0_0] : memref<8x32xf32, #tpu.memory_space<vmem>>, vector<8x32xf32>
    %1 = arith.truncf %0 : vector<8x32xf32> to vector<8x32xbf16>
    %c0_1 = arith.constant 0 : index
    %c0_2 = arith.constant 0 : index
    %2 = vector.load %arg2[%c0_1, %c0_2] : memref<32x128xbf16, #tpu.memory_space<vmem>>, vector<32x128xbf16>
    %cst = arith.constant dense<0.000000e+00> : vector<8x128xf32>
    %3 = tpu.matmul %1, %2, %cst {dimension_numbers = #tpu.dot_dimension_numbers<[1], [0], [0], [1], [0, 0, 1, 1], [], []>} : vector<8x32xbf16>, vector<32x128xbf16>, vector<8x128xf32> -> vector<8x128xf32>
    %c0_3 = arith.constant 0 : index
    %c0_4 = arith.constant 0 : index
    %4 = vector.load %arg3[%c0_3, %c0_4] : memref<1x128xf32, #tpu.memory_space<vmem>>, vector<1x128xf32>
    %5 = vector.broadcast %4 : vector<1x128xf32> to vector<8x128xf32>
    %6 = arith.addf %3, %5 : vector<8x128xf32>
    %7 = arith.truncf %6 : vector<8x128xf32> to vector<8x128xbf16>
    %c0_5 = arith.constant 0 : index
    %c0_6 = arith.constant 0 : index
    %8 = vector.load %arg4[%c0_5, %c0_6] : memref<128x32xbf16, #tpu.memory_space<vmem>>, vector<128x32xbf16>
    %cst_7 = arith.constant dense<0.000000e+00> : vector<8x32xf32>
    %9 = tpu.matmul %7, %8, %cst_7 {dimension_numbers = #tpu.dot_dimension_numbers<[1], [0], [0], [1], [0, 0, 1, 1], [], []>} : vector<8x128xbf16>, vector<128x32xbf16>, vector<8x32xf32> -> vector<8x32xf32>
    %c0_8 = arith.constant 0 : index
    %c0_9 = arith.constant 0 : index
    %10 = vector.load %arg5[%c0_8, %c0_9] : memref<1x32xf32, #tpu.memory_space<vmem>>, vector<1x32xf32>
    %11 = vector.broadcast %10 : vector<1x32xf32> to vector<8x32xf32>
    %12 = arith.addf %9, %11 : vector<8x32xf32>
    %13 = arith.truncf %12 : vector<8x32xf32> to vector<8x32xbf16>
    %c0_10 = arith.constant 0 : index
    %c0_11 = arith.constant 0 : index
    %14 = vector.load %arg6[%c0_10, %c0_11] : memref<8x32xbf16, #tpu.memory_space<vmem>>, vector<8x32xbf16>
    tpu.vector_store %arg6[%c0_10, %c0_11], %13 {strides = array<i32>} : memref<8x32xbf16, #tpu.memory_space<vmem>>, vector<8x32xbf16>,
    return
  }
  func.func @transform_0(%arg0: i32) -> (i32, i32) {
    %c0_i32 = arith.constant 0 : i32
    %c0_i32_0 = arith.constant 0 : i32
    return %arg0, %c0_i32 : i32, i32
  }
  func.func @transform_1(%arg0: i32) -> (i32, i32) {
    %c0_i32 = arith.constant 0 : i32
    %c0_i32_0 = arith.constant 0 : i32
    %c0_i32_1 = arith.constant 0 : i32
    return %c0_i32, %c0_i32_0 : i32, i32
  }
  func.func @transform_2(%arg0: i32) -> (i32, i32) {
    %c0_i32 = arith.constant 0 : i32
    %c0_i32_0 = arith.constant 0 : i32
    %c0_i32_1 = arith.constant 0 : i32
    return %c0_i32, %c0_i32_0 : i32, i32
  }
  func.func @transform_3(%arg0: i32) -> (i32, i32) {
    %c0_i32 = arith.constant 0 : i32
    %c0_i32_0 = arith.constant 0 : i32
    %c0_i32_1 = arith.constant 0 : i32
    return %c0_i32, %c0_i32_0 : i32, i32
  }
  func.func @transform_4(%arg0: i32) -> (i32, i32) {
    %c0_i32 = arith.constant 0 : i32
    %c0_i32_0 = arith.constant 0 : i32
    %c0_i32_1 = arith.constant 0 : i32
    return %c0_i32, %c0_i32_0 : i32, i32
  }
  func.func @transform_5(%arg0: i32) -> (i32, i32) {
    %c0_i32 = arith.constant 0 : i32
    %c0_i32_0 = arith.constant 0 : i32
    return %arg0, %c0_i32 : i32, i32
  }
}

</mosaic_0001>

<llo_original>
// kernel: tpu_custom_call.1
$region0: #{tpu_custom_call.1}
  #allocation0 [shape = 'u32[]', space=smem, size = 0x4, offset = 0x4, fixed_abs, tag = 'smem constant byte address 0x4 - core index']
  #allocation1 [shape = 'u32[144,128]{1,0:T(1,128)}', space=vmem, size = 0x12000, scoped, tag = 'internal scratch']
  %s0 = inlined_call_operand.vmem [shape: f32[16,32], index: 0, kind: input, shape index: {}]
  %s1 = inlined_call_operand.vmem [shape: bf16[32,128], index: 1, kind: input, shape index: {}]
  %s2 = inlined_call_operand.vmem [shape: f32[1,128], index: 2, kind: input, shape index: {}]
  %s3 = inlined_call_operand.vmem [shape: bf16[128,32], index: 3, kind: input, shape index: {}]
  %s4 = inlined_call_operand.vmem [shape: f32[1,32], index: 4, kind: input, shape index: {}]
  %s5 = inlined_call_operand.hbm [shape: bf16[16,32], index: 5, kind: output, shape index: {}]
  %s6 = sld [smem:[#allocation0]]
  $region53: #{tpu_custom_call.1} parent=0
    _
  %s8 = ssub.s32 1, %s6
  %s9 = scalar_select 0, %s8, %s6
  $region1: #{tpu_custom_call.1} parent=0
    #allocation2 [shape = 'u8[4096]{0}', space=vmem, size = 0x1000, scoped, tag = 'output window, operand 0']
    #allocation3 [shape = 's32[2]{0}', space=sflag, size = 0x8, scoped, tag = 'scoped memory for tpu_custom_call.1']
    %10 = vsyncpa [#allocation3], 0
    %s11 = scalar_lea.sflag [#allocation3], 1
    %12 = vsyncpa %s11, 0
    loop: start=0, step=1, limit=4
    $region2: #{tpu_custom_call.1} parent=1 // loop_pre_header
      _
    $region3: #{tpu_custom_call.1} parent=1 // loop_header
      %s14 = sphi 0, %s18
      %p15 = scmp.ge.s32.totalorder %s14, 4
      %s24 = sphi 0, %s26
      %s27 = sphi 0, %s24
      %s28 = sphi 0, %s27
      %s44 = sphi 0, %s28
      %s48 = sphi 0, %s48
      %s50 = sphi 0, %s48
      %s51 = sphi 0, %s50
      %s65 = sphi 0, %s51
      %s69 = sphi 0, %s69
      %s71 = sphi 0, %s69
      %s72 = sphi 0, %s71
      %s86 = sphi 0, %s72
      %s90 = sphi 0, %s90
      %s92 = sphi 0, %s90
      %s93 = sphi 0, %s92
      %s107 = sphi 0, %s93
      %s111 = sphi 0, %s111
      %s113 = sphi 0, %s111
      %s114 = sphi 0, %s113
      %s128 = sphi 0, %s114
      %s134 = sphi 0, %s136
      %s137 = sphi 0, %s134
      %s138 = sphi 0, %s137
      %s154 = sphi 0, %s138
    $region4: #{tpu_custom_call.1} parent=1 // loop_header_branch
      %17 = sbr.rel (%p15) target = $region8
    $region5: #{tpu_custom_call.1} parent=1 // loop_body
      %s19 = ssub.s32 %s14, 1
      %s20 = ssub.s32 %s14, 2
      %s21 = sadd.s32 %s14, 1
      %s22 = ssub.s32 %s14, %s21
      %p23 = scmp.eq.s32.totalorder %s22, 0
      %s25 = sadd.s32 %s24, 1
      %s26 = scalar_select %p23, %s24, %s25
      %p29 = pneg %p23
      %p30 = scmp.eq.s32.totalorder %s14, 1
      %p31 = por %p29, %p30
      %p32 = scmp.ne.s32.totalorder %s24, %s27
      %p33 = scmp.eq.s32.totalorder %s14, 0
      %p34 = por %p32, %p33
      %p35 = scmp.ne.s32.totalorder %s24, %s27
      %p36 = scmp.eq.s32.totalorder %s19, 1
      %p37 = por %p35, %p36
      %p38 = scmp.ne.s32.totalorder %s27, %s28
      %p39 = scmp.eq.s32.totalorder %s19, 0
      %p40 = por %p38, %p39
      %p41 = scmp.ne.s32.totalorder %s27, %s28
      %p42 = scmp.eq.s32.totalorder %s20, 1
      %p43 = por %p41, %p42
      %p45 = scmp.ne.s32.totalorder %s28, %s44
      %p46 = scmp.eq.s32.totalorder %s20, 0
      %p47 = por %p45, %p46
      %s49 = sadd.s32 %s48, 1
      %p52 = scmp.eq.s32.totalorder %s14, 1
      %p53 = scmp.ne.s32.totalorder %s48, %s50
      %p54 = scmp.eq.s32.totalorder %s14, 0
      %p55 = por %p53, %p54
      %p56 = scmp.ne.s32.totalorder %s48, %s50
      %p57 = scmp.eq.s32.totalorder %s19, 1
      %p58 = por %p56, %p57
      %p59 = scmp.ne.s32.totalorder %s50, %s51
      %p60 = scmp.eq.s32.totalorder %s19, 0
      %p61 = por %p59, %p60
      %p62 = scmp.ne.s32.totalorder %s50, %s51
      %p63 = scmp.eq.s32.totalorder %s20, 1
      %p64 = por %p62, %p63
      %p66 = scmp.ne.s32.totalorder %s51, %s65
      %p67 = scmp.eq.s32.totalorder %s20, 0
      %p68 = por %p66, %p67
      %s70 = sadd.s32 %s69, 1
      %p73 = scmp.eq.s32.totalorder %s14, 1
      %p74 = scmp.ne.s32.totalorder %s69, %s71
      %p75 = scmp.eq.s32.totalorder %s14, 0
      %p76 = por %p74, %p75
      %p77 = scmp.ne.s32.totalorder %s69, %s71
      %p78 = scmp.eq.s32.totalorder %s19, 1
      %p79 = por %p77, %p78
      %p80 = scmp.ne.s32.totalorder %s71, %s72
      %p81 = scmp.eq.s32.totalorder %s19, 0
      %p82 = por %p80, %p81
      %p83 = scmp.ne.s32.totalorder %s71, %s72
      %p84 = scmp.eq.s32.totalorder %s20, 1
      %p85 = por %p83, %p84
      %p87 = scmp.ne.s32.totalorder %s72, %s86
      %p88 = scmp.eq.s32.totalorder %s20, 0
      %p89 = por %p87, %p88
      %s91 = sadd.s32 %s90, 1
      %p94 = scmp.eq.s32.totalorder %s14, 1
      %p95 = scmp.ne.s32.totalorder %s90, %s92
      %p96 = scmp.eq.s32.totalorder %s14, 0
      %p97 = por %p95, %p96
      %p98 = scmp.ne.s32.totalorder %s90, %s92
      %p99 = scmp.eq.s32.totalorder %s19, 1
      %p100 = por %p98, %p99
      %p101 = scmp.ne.s32.totalorder %s92, %s93
      %p102 = scmp.eq.s32.totalorder %s19, 0
      %p103 = por %p101, %p102
      %p104 = scmp.ne.s32.totalorder %s92, %s93
      %p105 = scmp.eq.s32.totalorder %s20, 1
      %p106 = por %p104, %p105
      %p108 = scmp.ne.s32.totalorder %s93, %s107
      %p109 = scmp.eq.s32.totalorder %s20, 0
      %p110 = por %p108, %p109
      %s112 = sadd.s32 %s111, 1
      %p115 = scmp.eq.s32.totalorder %s14, 1
      %p116 = scmp.ne.s32.totalorder %s111, %s113
      %p117 = scmp.eq.s32.totalorder %s14, 0
      %p118 = por %p116, %p117
      %p119 = scmp.ne.s32.totalorder %s111, %s113
      %p120 = scmp.eq.s32.totalorder %s19, 1
      %p121 = por %p119, %p120
      %p122 = scmp.ne.s32.totalorder %s113, %s114
      %p123 = scmp.eq.s32.totalorder %s19, 0
      %p124 = por %p122, %p123
      %p125 = scmp.ne.s32.totalorder %s113, %s114
      %p126 = scmp.eq.s32.totalorder %s20, 1
      %p127 = por %p125, %p126
      %p129 = scmp.ne.s32.totalorder %s114, %s128
      %p130 = scmp.eq.s32.totalorder %s20, 0
      %p131 = por %p129, %p130
      %s132 = ssub.s32 %s14, %s21
      %p133 = scmp.eq.s32.totalorder %s132, 0
      %s135 = sadd.s32 %s134, 1
      %s136 = scalar_select %p133, %s134, %s135
      %p139 = pneg %p133
      %p140 = scmp.eq.s32.totalorder %s14, 1
      %p141 = por %p139, %p140
      %p142 = scmp.ne.s32.totalorder %s134, %s137
      %p143 = scmp.eq.s32.totalorder %s14, 0
      %p144 = por %p142, %p143
      %p145 = scmp.ne.s32.totalorder %s134, %s137
      %p146 = scmp.eq.s32.totalorder %s19, 1
      %p147 = por %p145, %p146
      %p148 = scmp.ne.s32.totalorder %s137, %s138
      %p149 = scmp.eq.s32.totalorder %s19, 0
      %p150 = por %p148, %p149
      %p151 = scmp.ne.s32.totalorder %s137, %s138
      %p152 = scmp.eq.s32.totalorder %s20, 1
      %p153 = por %p151, %p152
      %p155 = scmp.ne.s32.totalorder %s138, %s154
      %p156 = scmp.eq.s32.totalorder %s20, 0
      %p157 = por %p155, %p156
      %p158 = scmp.le.s32.totalorder 1, %s14
      %p159 = scmp.lt.s32.totalorder %s14, 3
      %p160 = pnand %p158, %p159
      %p161 = pneg %p160
      // Predicated region
      $region9: #{tpu_custom_call.1} parent=5 // pred_check
        _
      $region10: #{tpu_custom_call.1} parent=5 // pred_check_branch
        %163 = sbr.rel (%p160) target = $region12
      $region11: #{tpu_custom_call.1} parent=5 // pred_region
        %s164 = ssub.s32 %s14, 1
        // Predicated region
        $region13: #{tpu_custom_call.1} parent=11 // pred_check
          %p165 = pneg %p61
        $region14: #{tpu_custom_call.1} parent=11 // pred_check_branch
          %167 = sbr.rel (%p165) target = $region16
        $region15: #{tpu_custom_call.1} parent=11 // pred_region
          _
        $region16: #{tpu_custom_call.1} parent=11 // pred_fallthru
          _
        // Predicated region
        $region17: #{tpu_custom_call.1} parent=11 // pred_check
          %p168 = pneg %p82
        $region18: #{tpu_custom_call.1} parent=11 // pred_check_branch
          %170 = sbr.rel (%p168) target = $region20
        $region19: #{tpu_custom_call.1} parent=11 // pred_region
          _
        $region20: #{tpu_custom_call.1} parent=11 // pred_fallthru
          _
        // Predicated region
        $region21: #{tpu_custom_call.1} parent=11 // pred_check
          %p171 = pneg %p103
        $region22: #{tpu_custom_call.1} parent=11 // pred_check_branch
          %173 = sbr.rel (%p171) target = $region24
        $region23: #{tpu_custom_call.1} parent=11 // pred_region
          _
        $region24: #{tpu_custom_call.1} parent=11 // pred_fallthru
          _
        // Predicated region
        $region25: #{tpu_custom_call.1} parent=11 // pred_check
          %p174 = pneg %p124
        $region26: #{tpu_custom_call.1} parent=11 // pred_check_branch
          %176 = sbr.rel (%p174) target = $region28
        $region27: #{tpu_custom_call.1} parent=11 // pred_region
          _
        $region28: #{tpu_custom_call.1} parent=11 // pred_fallthru
          _
      $region12: #{tpu_custom_call.1} parent=5 // pred_fallthru
        _
      %p177 = scmp.lt.s32.totalorder %s14, 2
      // Predicated region
      $region29: #{tpu_custom_call.1} parent=5 // pred_check
        %p178 = pneg %p177
      $region30: #{tpu_custom_call.1} parent=5 // pred_check_branch
        %180 = sbr.rel (%p178) target = $region32
      $region31: #{tpu_custom_call.1} parent=5 // pred_region
        // Predicated region
        $region33: #{tpu_custom_call.1} parent=31 // pred_check
          %p181 = pneg %p34
        $region34: #{tpu_custom_call.1} parent=31 // pred_check_branch
          %183 = sbr.rel (%p181) target = $region36
        $region35: #{tpu_custom_call.1} parent=31 // pred_region
          %p184 = scmp.lt.s32.totalorder %s14, 1
          %s185 = scalar_select %p184, %s14, 1
          %s186 = smul.addr %s185, 8
          %s187 = scalar_lea.vmem %s0, %s186
        $region36: #{tpu_custom_call.1} parent=31 // pred_fallthru
          _
      $region32: #{tpu_custom_call.1} parent=5 // pred_fallthru
        _
      %p188 = scmp.le.s32.totalorder 1, %s14
      %p189 = scmp.lt.s32.totalorder %s14, 3
      %p190 = pnand %p188, %p189
      %p191 = pneg %p190
      // Predicated region
      $region37: #{tpu_custom_call.1} parent=5 // pred_check
        _
      $region38: #{tpu_custom_call.1} parent=5 // pred_check_branch
        %193 = sbr.rel (%p190) target = $region40
      $region39: #{tpu_custom_call.1} parent=5 // pred_region
        %s194 = ssub.s32 %s14, 1
        %p195 = scmp.lt.s32.totalorder %s19, 1
        %s196 = scalar_select %p195, %s19, 1
        %s197 = smul.addr %s196, 8
        %s198 = scalar_lea.vmem %s0, %s197
        %p199 = pneg %p40
        %p200 = pneg %p37
        %p201 = pneg %p61
        %p202 = pneg %p58
        %p203 = pneg %p82
        %p204 = pneg %p79
        %p205 = pneg %p103
        %p206 = pneg %p100
        %p207 = pneg %p124
        %p208 = pneg %p121
        %p209 = pneg %p150
        %p210 = pneg %p147
        %s211 = sand.u32 %s137, 1
        %s212 = scalar_lea.sflag [#allocation3], %s211
        %s213 = sand.u32 %s137, 1
        %s214 = smul.addr %s213, 4
        %s215 = scalar_lea.vmem [#allocation2], %s214
        %p216 = scmp.lt.s32.totalorder %s19, 1
        %s217 = scalar_select %p216, %s19, 1
        %s218 = smul.addr %s217, 8
        %s219 = scalar_lea.vmem %s0, %s218
        %v221 = vld [vmem:[%s219] sm:$0xff]
        %v222 = vpack.c.bf16 %v221, %v221
        %v223 = vld [vmem:[%s1] sm:$0xf]
        %v224 = vld [vmem:[%s1 + $0x4] sm:$0xf]
        %v225 = vld [vmem:[%s1 + $0x8] sm:$0xf]
        %v226 = vld [vmem:[%s1 + $0xc] sm:$0xf]
        %v227 = vld [vmem:[%s2] sm:$0x1]
        %v229 = vlaneseq
        %v230 = vshrl.u32 %v229, 7
        %v231 = vsub.s32 0, %v230
        %v232 = vrot.slane %v227, %v231
        %v238 = vunpack.c.l.b16 %v223
        %v239 = vunpack.c.l.b16 %v224
        %v240 = vunpack.c.l.b16 %v225
        %v241 = vunpack.c.l.b16 %v226
        %v242 = vpack.c.b16 %v239, %v238
        %v243 = vpack.c.b16 %v241, %v240
        %vm246 = vcmask 261120
        %v248 = vsel %vm246, %v222, 0
        %250 = vmatprep.subr.bf16.mxu0 0
        %251 = vmatpush1.bf16.msra.mxu0 %v242
        %252 = vmatprep.subr.bf16.mxu0 0
        %253 = vmatpush1.bf16.msra.mxu0 %v243
        %254 = vmatprep.subr.bf16.mxu0 0
        %255 = vmatpush1.bf16.msra.mxu0 0
        %256 = vmatprep.subr.bf16.mxu0 0
        %257 = vmatpush1.bf16.msra.mxu0 0
        %258 = vmatprep.subr.bf16.mxu0 0
        %259 = vmatpush1.bf16.msra.mxu0 0
        %260 = vmatprep.subr.bf16.mxu0 0
        %261 = vmatpush1.bf16.msra.mxu0 0
        %262 = vmatprep.subr.bf16.mxu0 0
        %263 = vmatpush1.bf16.msra.mxu0 0
        %264 = vmatprep.subr.bf16.mxu0 0
        %265 = vmatpush1.bf16.msra.mxu0 0
        %266 = vmatprep.subr.bf16.mxu0 0
        %267 = vmatpush1.bf16.msra.mxu0 0
        %268 = vmatprep.subr.bf16.mxu0 0
        %269 = vmatpush1.bf16.msra.mxu0 0
        %270 = vmatprep.subr.bf16.mxu0 0
        %271 = vmatpush1.bf16.msra.mxu0 0
        %272 = vmatprep.subr.bf16.mxu0 0
        %273 = vmatpush1.bf16.msra.mxu0 0
        %274 = vmatprep.subr.bf16.mxu0 0
        %275 = vmatpush1.bf16.msra.mxu0 0
        %276 = vmatprep.subr.bf16.mxu0 0
        %277 = vmatpush1.bf16.msra.mxu0 0
        %278 = vmatprep.subr.bf16.mxu0 0
        %279 = vmatpush1.bf16.msra.mxu0 0
        %280 = vmatprep.subr.bf16.mxu0 0
        %281 = vmatpush1.bf16.msra.mxu0 0
        %282 = vmatprep.mubr.bf16.mxu0 0
        %283 = vmatmul.mubr.bf16.gmra.mrb[0].mxu0 %v248
        %v284 = vpop.f32.mrb[0].mxu0
        %v285 = vadd.f32 %v232, %v284
        %v286 = vpop.f32.mrb[0].mxu0
        %v287 = vpop.f32.mrb[0].mxu0
        %v288 = vpop.f32.mrb[0].mxu0
        %289 = vdwg.mxu0
        %v290 = vpack.c.bf16 %v285, %v285
        %v291 = vld [vmem:[%s3] sm:$0xf]
        %v292 = vld [vmem:[%s3 + $0x4] sm:$0xf]
        %v293 = vld [vmem:[%s3 + $0x8] sm:$0xf]
        %v294 = vld [vmem:[%s3 + $0xc] sm:$0xf]
        %v295 = vld [vmem:[%s3 + $0x10] sm:$0xf]
        %v296 = vld [vmem:[%s3 + $0x14] sm:$0xf]
        %v297 = vld [vmem:[%s3 + $0x18] sm:$0xf]
        %v298 = vld [vmem:[%s3 + $0x1c] sm:$0xf]
        %v299 = vld [vmem:[%s3 + $0x20] sm:$0xf]
        %v300 = vld [vmem:[%s3 + $0x24] sm:$0xf]
        %v301 = vld [vmem:[%s3 + $0x28] sm:$0xf]
        %v302 = vld [vmem:[%s3 + $0x2c] sm:$0xf]
        %v303 = vld [vmem:[%s3 + $0x30] sm:$0xf]
        %v304 = vld [vmem:[%s3 + $0x34] sm:$0xf]
        %v305 = vld [vmem:[%s3 + $0x38] sm:$0xf]
        %v306 = vld [vmem:[%s3 + $0x3c] sm:$0xf]
        %v307 = vld [vmem:[%s4] sm:$0x1]
        %v309 = vlaneseq
        %v310 = vshrl.u32 %v309, 7
        %v311 = vsub.s32 0, %v310
        %v312 = vrot.slane %v307, %v311
        %v330 = vunpack.c.l.b16 %v291
        %v331 = vunpack.c.l.b16 %v292
        %v332 = vunpack.c.l.b16 %v293
        %v333 = vunpack.c.l.b16 %v294
        %v334 = vunpack.c.l.b16 %v295
        %v335 = vunpack.c.l.b16 %v296
        %v336 = vunpack.c.l.b16 %v297
        %v337 = vunpack.c.l.b16 %v298
        %v338 = vunpack.c.l.b16 %v299
        %v339 = vunpack.c.l.b16 %v300
        %v340 = vunpack.c.l.b16 %v301
        %v341 = vunpack.c.l.b16 %v302
        %v342 = vunpack.c.l.b16 %v303
        %v343 = vunpack.c.l.b16 %v304
        %v344 = vunpack.c.l.b16 %v305
        %v345 = vunpack.c.l.b16 %v306
        %v346 = vpack.c.b16 %v331, %v330
        %v347 = vpack.c.b16 %v333, %v332
        %v348 = vpack.c.b16 %v335, %v334
        %v349 = vpack.c.b16 %v337, %v336
        %v350 = vpack.c.b16 %v339, %v338
        %v351 = vpack.c.b16 %v341, %v340
        %v352 = vpack.c.b16 %v343, %v342
        %v353 = vpack.c.b16 %v345, %v344
        %362 = vmatprep.subr.bf16.mxu0 0
        %363 = vmatpush1.bf16.msra.mxu0 %v346
        %364 = vmatprep.subr.bf16.mxu0 0
        %365 = vmatpush1.bf16.msra.mxu0 %v347
        %366 = vmatprep.subr.bf16.mxu0 0
        %367 = vmatpush1.bf16.msra.mxu0 %v348
        %368 = vmatprep.subr.bf16.mxu0 0
        %369 = vmatpush1.bf16.msra.mxu0 %v349
        %370 = vmatprep.subr.bf16.mxu0 0
        %371 = vmatpush1.bf16.msra.mxu0 %v350
        %372 = vmatprep.subr.bf16.mxu0 0
        %373 = vmatpush1.bf16.msra.mxu0 %v351
        %374 = vmatprep.subr.bf16.mxu0 0
        %375 = vmatpush1.bf16.msra.mxu0 %v352
        %376 = vmatprep.subr.bf16.mxu0 0
        %377 = vmatpush1.bf16.msra.mxu0 %v353
        %378 = vmatprep.subr.bf16.mxu0 0
        %379 = vmatpush1.bf16.msra.mxu0 0
        %380 = vmatprep.subr.bf16.mxu0 0
        %381 = vmatpush1.bf16.msra.mxu0 0
        %382 = vmatprep.subr.bf16.mxu0 0
        %383 = vmatpush1.bf16.msra.mxu0 0
        %384 = vmatprep.subr.bf16.mxu0 0
        %385 = vmatpush1.bf16.msra.mxu0 0
        %386 = vmatprep.subr.bf16.mxu0 0
        %387 = vmatpush1.bf16.msra.mxu0 0
        %388 = vmatprep.subr.bf16.mxu0 0
        %389 = vmatpush1.bf16.msra.mxu0 0
        %390 = vmatprep.subr.bf16.mxu0 0
        %391 = vmatpush1.bf16.msra.mxu0 0
        %392 = vmatprep.subr.bf16.mxu0 0
        %393 = vmatpush1.bf16.msra.mxu0 0
        %394 = vmatprep.mubr.bf16.mxu0 0
        %395 = vmatmul.mubr.bf16.gmra.mrb[0].mxu0 %v290
        %v396 = vpop.f32.mrb[0].mxu0
        %v397 = vadd.f32 %v312, %v396
        %v398 = vpop.f32.mrb[0].mxu0
        %v399 = vpop.f32.mrb[0].mxu0
        %v400 = vpop.f32.mrb[0].mxu0
        %401 = vdwg.mxu0
        %v402 = vpack.c.bf16 %v397, %v397
        %vm403 = vcmask 257024
        %404 = vst.msk [vmem:[%s215] sm:$0xf] %vm403, %v402
        %s405 = sand.u32 %s137, 1
        %s406 = scalar_lea.sflag [#allocation3], %s405
        %s407 = sand.u32 %s137, 1
        %s408 = smul.addr %s407, 4
        %s409 = scalar_lea.vmem [#allocation2], %s408
        // Predicated region
        $region41: #{tpu_custom_call.1} parent=39 // pred_check
          %p410 = pneg %p147
        $region42: #{tpu_custom_call.1} parent=39 // pred_check_branch
          %412 = sbr.rel (%p410) target = $region44
        $region43: #{tpu_custom_call.1} parent=39 // pred_region
          %s414 = ssub.s32 64, 64
          %415 = vsyncadd %s406, %s414
          %s416 = smul.addr %s19, 64
          %s417 = scalar_lea.hbm %s5, %s416
          %s419 = sshll.u32 %s409, 4
          %s420 = int_to_ptr.vmem [resolvable:$true] %s419
          %422 = dma.vmem_to_hbm [thread:$0]  %s420, 64, %s417, %s406
        $region44: #{tpu_custom_call.1} parent=39 // pred_fallthru
          _
      $region40: #{tpu_custom_call.1} parent=5 // pred_fallthru
        _
      %p423 = scmp.le.s32.totalorder 2, %s14
      // Predicated region
      $region45: #{tpu_custom_call.1} parent=5 // pred_check
        %p424 = pneg %p423
      $region46: #{tpu_custom_call.1} parent=5 // pred_check_branch
        %426 = sbr.rel (%p424) target = $region48
      $region47: #{tpu_custom_call.1} parent=5 // pred_region
        %s427 = ssub.s32 %s14, 2
        // Predicated region
        $region49: #{tpu_custom_call.1} parent=47 // pred_check
          %p428 = pneg %p153
        $region50: #{tpu_custom_call.1} parent=47 // pred_check_branch
          %430 = sbr.rel (%p428) target = $region52
        $region51: #{tpu_custom_call.1} parent=47 // pred_region
          %s431 = sand.u32 %s138, 1
          %s432 = scalar_lea.sflag [#allocation3], %s431
          %s433 = sand.u32 %s138, 1
          %s434 = smul.addr %s433, 4
          %s435 = scalar_lea.vmem [#allocation2], %s434
          %436 = dma.done %s432, 64
        $region52: #{tpu_custom_call.1} parent=47 // pred_fallthru
          _
      $region48: #{tpu_custom_call.1} parent=5 // pred_fallthru
        _
    $region6: #{tpu_custom_call.1} parent=1 // loop_footer
      %s18 = sadd.s32 1, %s14
    $region7: #{tpu_custom_call.1} parent=1 // loop_footer_branch
      %13 = sbr.rel target = $region3
    $region8: #{tpu_custom_call.1} parent=1 // loop_exit
      _
    %437 = vsyncpa [#allocation3], 1
    %s438 = scalar_lea.sflag [#allocation3], 1
    %439 = vsyncpa %s438, 1

// kernel: tpu_custom_call.1
$region0: #{tpu_custom_call.1}
  #allocation0 [shape = 'u32[]', space=smem, size = 0x4, offset = 0x4, fixed_abs, tag = 'smem constant byte address 0x4 - core index']
  #allocation1 [shape = 'u32[144,128]{1,0:T(1,128)}', space=vmem, size = 0x12000, scoped, tag = 'internal scratch']
  %s0 = inlined_call_operand.vmem [shape: f32[16,32], index: 0, kind: input, shape index: {}]
  %s1 = inlined_call_operand.vmem [shape: bf16[32,128], index: 1, kind: input, shape index: {}]
  %s2 = inlined_call_operand.vmem [shape: f32[1,128], index: 2, kind: input, shape index: {}]
  %s3 = inlined_call_operand.vmem [shape: bf16[128,32], index: 3, kind: input, shape index: {}]
  %s4 = inlined_call_operand.vmem [shape: f32[1,32], index: 4, kind: input, shape index: {}]
  %s5 = inlined_call_operand.hbm [shape: bf16[16,32], index: 5, kind: output, shape index: {}]
  %s6 = sld [smem:[#allocation0]]
  $region53: #{tpu_custom_call.1} parent=0
    _
  %s8 = ssub.s32 1, %s6
  %s9 = scalar_select 0, %s8, %s6
  $region1: #{tpu_custom_call.1} parent=0
    #allocation2 [shape = 'u8[4096]{0}', space=vmem, size = 0x1000, scoped, tag = 'output window, operand 0']
    #allocation3 [shape = 's32[2]{0}', space=sflag, size = 0x8, scoped, tag = 'scoped memory for tpu_custom_call.1']
    %10 = vsyncpa [#allocation3], 0
    %s11 = scalar_lea.sflag [#allocation3], 1
    %12 = vsyncpa %s11, 0
    loop: start=0, step=1, limit=4
    $region2: #{tpu_custom_call.1} parent=1 // loop_pre_header
      _
    $region3: #{tpu_custom_call.1} parent=1 // loop_header
      %s14 = sphi 0, %s18
      %p15 = scmp.ge.s32.totalorder %s14, 4
      %s24 = sphi 0, %s26
      %s27 = sphi 0, %s24
      %s28 = sphi 0, %s27
      %s44 = sphi 0, %s28
      %s48 = sphi 0, %s48
      %s50 = sphi 0, %s48
      %s51 = sphi 0, %s50
      %s65 = sphi 0, %s51
      %s69 = sphi 0, %s69
      %s71 = sphi 0, %s69
      %s72 = sphi 0, %s71
      %s86 = sphi 0, %s72
      %s90 = sphi 0, %s90
      %s92 = sphi 0, %s90
      %s93 = sphi 0, %s92
      %s107 = sphi 0, %s93
      %s111 = sphi 0, %s111
      %s113 = sphi 0, %s111
      %s114 = sphi 0, %s113
      %s128 = sphi 0, %s114
      %s134 = sphi 0, %s136
      %s137 = sphi 0, %s134
      %s138 = sphi 0, %s137
      %s154 = sphi 0, %s138
    $region4: #{tpu_custom_call.1} parent=1 // loop_header_branch
      %17 = sbr.rel (%p15) target = $region8
    $region5: #{tpu_custom_call.1} parent=1 // loop_body
      %s19 = ssub.s32 %s14, 1
      %s20 = ssub.s32 %s14, 2
      %s21 = sadd.s32 %s14, 1
      %s22 = ssub.s32 %s14, %s21
      %p23 = scmp.eq.s32.totalorder %s22, 0
      %s25 = sadd.s32 %s24, 1
      %s26 = scalar_select %p23, %s24, %s25
      %p29 = pneg %p23
      %p30 = scmp.eq.s32.totalorder %s14, 1
      %p31 = por %p29, %p30
      %p32 = scmp.ne.s32.totalorder %s24, %s27
      %p33 = scmp.eq.s32.totalorder %s14, 0
      %p34 = por %p32, %p33
      %p35 = scmp.ne.s32.totalorder %s24, %s27
      %p36 = scmp.eq.s32.totalorder %s19, 1
      %p37 = por %p35, %p36
      %p38 = scmp.ne.s32.totalorder %s27, %s28
      %p39 = scmp.eq.s32.totalorder %s19, 0
      %p40 = por %p38, %p39
      %p41 = scmp.ne.s32.totalorder %s27, %s28
      %p42 = scmp.eq.s32.totalorder %s20, 1
      %p43 = por %p41, %p42
      %p45 = scmp.ne.s32.totalorder %s28, %s44
      %p46 = scmp.eq.s32.totalorder %s20, 0
      %p47 = por %p45, %p46
      %s49 = sadd.s32 %s48, 1
      %p52 = scmp.eq.s32.totalorder %s14, 1
      %p53 = scmp.ne.s32.totalorder %s48, %s50
      %p54 = scmp.eq.s32.totalorder %s14, 0
      %p55 = por %p53, %p54
      %p56 = scmp.ne.s32.totalorder %s48, %s50
      %p57 = scmp.eq.s32.totalorder %s19, 1
      %p58 = por %p56, %p57
      %p59 = scmp.ne.s32.totalorder %s50, %s51
      %p60 = scmp.eq.s32.totalorder %s19, 0
      %p61 = por %p59, %p60
      %p62 = scmp.ne.s32.totalorder %s50, %s51
      %p63 = scmp.eq.s32.totalorder %s20, 1
      %p64 = por %p62, %p63
      %p66 = scmp.ne.s32.totalorder %s51, %s65
      %p67 = scmp.eq.s32.totalorder %s20, 0
      %p68 = por %p66, %p67
      %s70 = sadd.s32 %s69, 1
      %p73 = scmp.eq.s32.totalorder %s14, 1
      %p74 = scmp.ne.s32.totalorder %s69, %s71
      %p75 = scmp.eq.s32.totalorder %s14, 0
      %p76 = por %p74, %p75
      %p77 = scmp.ne.s32.totalorder %s69, %s71
      %p78 = scmp.eq.s32.totalorder %s19, 1
      %p79 = por %p77, %p78
      %p80 = scmp.ne.s32.totalorder %s71, %s72
      %p81 = scmp.eq.s32.totalorder %s19, 0
      %p82 = por %p80, %p81
      %p83 = scmp.ne.s32.totalorder %s71, %s72
      %p84 = scmp.eq.s32.totalorder %s20, 1
      %p85 = por %p83, %p84
      %p87 = scmp.ne.s32.totalorder %s72, %s86
      %p88 = scmp.eq.s32.totalorder %s20, 0
      %p89 = por %p87, %p88
      %s91 = sadd.s32 %s90, 1
      %p94 = scmp.eq.s32.totalorder %s14, 1
      %p95 = scmp.ne.s32.totalorder %s90, %s92
      %p96 = scmp.eq.s32.totalorder %s14, 0
      %p97 = por %p95, %p96
      %p98 = scmp.ne.s32.totalorder %s90, %s92
      %p99 = scmp.eq.s32.totalorder %s19, 1
      %p100 = por %p98, %p99
      %p101 = scmp.ne.s32.totalorder %s92, %s93
      %p102 = scmp.eq.s32.totalorder %s19, 0
      %p103 = por %p101, %p102
      %p104 = scmp.ne.s32.totalorder %s92, %s93
      %p105 = scmp.eq.s32.totalorder %s20, 1
      %p106 = por %p104, %p105
      %p108 = scmp.ne.s32.totalorder %s93, %s107
      %p109 = scmp.eq.s32.totalorder %s20, 0
      %p110 = por %p108, %p109
      %s112 = sadd.s32 %s111, 1
      %p115 = scmp.eq.s32.totalorder %s14, 1
      %p116 = scmp.ne.s32.totalorder %s111, %s113
      %p117 = scmp.eq.s32.totalorder %s14, 0
      %p118 = por %p116, %p117
      %p119 = scmp.ne.s32.totalorder %s111, %s113
      %p120 = scmp.eq.s32.totalorder %s19, 1
      %p121 = por %p119, %p120
      %p122 = scmp.ne.s32.totalorder %s113, %s114
      %p123 = scmp.eq.s32.totalorder %s19, 0
      %p124 = por %p122, %p123
      %p125 = scmp.ne.s32.totalorder %s113, %s114
      %p126 = scmp.eq.s32.totalorder %s20, 1
      %p127 = por %p125, %p126
      %p129 = scmp.ne.s32.totalorder %s114, %s128
      %p130 = scmp.eq.s32.totalorder %s20, 0
      %p131 = por %p129, %p130
      %s132 = ssub.s32 %s14, %s21
      %p133 = scmp.eq.s32.totalorder %s132, 0
      %s135 = sadd.s32 %s134, 1
      %s136 = scalar_select %p133, %s134, %s135
      %p139 = pneg %p133
      %p140 = scmp.eq.s32.totalorder %s14, 1
      %p141 = por %p139, %p140
      %p142 = scmp.ne.s32.totalorder %s134, %s137
      %p143 = scmp.eq.s32.totalorder %s14, 0
      %p144 = por %p142, %p143
      %p145 = scmp.ne.s32.totalorder %s134, %s137
      %p146 = scmp.eq.s32.totalorder %s19, 1
      %p147 = por %p145, %p146
      %p148 = scmp.ne.s32.totalorder %s137, %s138
      %p149 = scmp.eq.s32.totalorder %s19, 0
      %p150 = por %p148, %p149
      %p151 = scmp.ne.s32.totalorder %s137, %s138
      %p152 = scmp.eq.s32.totalorder %s20, 1
      %p153 = por %p151, %p152
      %p155 = scmp.ne.s32.totalorder %s138, %s154
      %p156 = scmp.eq.s32.totalorder %s20, 0
      %p157 = por %p155, %p156
      %p158 = scmp.le.s32.totalorder 1, %s14
      %p159 = scmp.lt.s32.totalorder %s14, 3
      %p160 = pnand %p158, %p159
      %p161 = pneg %p160
      // Predicated region
      $region9: #{tpu_custom_call.1} parent=5 // pred_check
        _
      $region10: #{tpu_custom_call.1} parent=5 // pred_check_branch
        %163 = sbr.rel (%p160) target = $region12
      $region11: #{tpu_custom_call.1} parent=5 // pred_region
        %s164 = ssub.s32 %s14, 1
        // Predicated region
        $region13: #{tpu_custom_call.1} parent=11 // pred_check
          %p165 = pneg %p61
        $region14: #{tpu_custom_call.1} parent=11 // pred_check_branch
          %167 = sbr.rel (%p165) target = $region16
        $region15: #{tpu_custom_call.1} parent=11 // pred_region
          _
        $region16: #{tpu_custom_call.1} parent=11 // pred_fallthru
          _
        // Predicated region
        $region17: #{tpu_custom_call.1} parent=11 // pred_check
          %p168 = pneg %p82
        $region18: #{tpu_custom_call.1} parent=11 // pred_check_branch
          %170 = sbr.rel (%p168) target = $region20
        $region19: #{tpu_custom_call.1} parent=11 // pred_region
          _
        $region20: #{tpu_custom_call.1} parent=11 // pred_fallthru
          _
        // Predicated region
        $region21: #{tpu_custom_call.1} parent=11 // pred_check
          %p171 = pneg %p103
        $region22: #{tpu_custom_call.1} parent=11 // pred_check_branch
          %173 = sbr.rel (%p171) target = $region24
        $region23: #{tpu_custom_call.1} parent=11 // pred_region
          _
        $region24: #{tpu_custom_call.1} parent=11 // pred_fallthru
          _
        // Predicated region
        $region25: #{tpu_custom_call.1} parent=11 // pred_check
          %p174 = pneg %p124
        $region26: #{tpu_custom_call.1} parent=11 // pred_check_branch
          %176 = sbr.rel (%p174) target = $region28
        $region27: #{tpu_custom_call.1} parent=11 // pred_region
          _
        $region28: #{tpu_custom_call.1} parent=11 // pred_fallthru
          _
      $region12: #{tpu_custom_call.1} parent=5 // pred_fallthru
        _
      %p177 = scmp.lt.s32.totalorder %s14, 2
      // Predicated region
      $region29: #{tpu_custom_call.1} parent=5 // pred_check
        %p178 = pneg %p177
      $region30: #{tpu_custom_call.1} parent=5 // pred_check_branch
        %180 = sbr.rel (%p178) target = $region32
      $region31: #{tpu_custom_call.1} parent=5 // pred_region
        // Predicated region
        $region33: #{tpu_custom_call.1} parent=31 // pred_check
          %p181 = pneg %p34
        $region34: #{tpu_custom_call.1} parent=31 // pred_check_branch
          %183 = sbr.rel (%p181) target = $region36
        $region35: #{tpu_custom_call.1} parent=31 // pred_region
          %p184 = scmp.lt.s32.totalorder %s14, 1
          %s185 = scalar_select %p184, %s14, 1
          %s186 = smul.addr %s185, 8
          %s187 = scalar_lea.vmem %s0, %s186
        $region36: #{tpu_custom_call.1} parent=31 // pred_fallthru
          _
      $region32: #{tpu_custom_call.1} parent=5 // pred_fallthru
        _
      %p188 = scmp.le.s32.totalorder 1, %s14
      %p189 = scmp.lt.s32.totalorder %s14, 3
      %p190 = pnand %p188, %p189
      %p191 = pneg %p190
      // Predicated region
      $region37: #{tpu_custom_call.1} parent=5 // pred_check
        _
      $region38: #{tpu_custom_call.1} parent=5 // pred_check_branch
        %193 = sbr.rel (%p190) target = $region40
      $region39: #{tpu_custom_call.1} parent=5 // pred_region
        %s194 = ssub.s32 %s14, 1
        %p195 = scmp.lt.s32.totalorder %s19, 1
        %s196 = scalar_select %p195, %s19, 1
        %s197 = smul.addr %s196, 8
        %s198 = scalar_lea.vmem %s0, %s197
        %p199 = pneg %p40
        %p200 = pneg %p37
        %p201 = pneg %p61
        %p202 = pneg %p58
        %p203 = pneg %p82
        %p204 = pneg %p79
        %p205 = pneg %p103
        %p206 = pneg %p100
        %p207 = pneg %p124
        %p208 = pneg %p121
        %p209 = pneg %p150
        %p210 = pneg %p147
        %s211 = sand.u32 %s137, 1
        %s212 = scalar_lea.sflag [#allocation3], %s211
        %s213 = sand.u32 %s137, 1
        %s214 = smul.addr %s213, 4
        %s215 = scalar_lea.vmem [#allocation2], %s214
        %p216 = scmp.lt.s32.totalorder %s19, 1
        %s217 = scalar_select %p216, %s19, 1
        %s218 = smul.addr %s217, 8
        %s219 = scalar_lea.vmem %s0, %s218
        %v221 = vld [vmem:[%s219] sm:$0xff]
        %v222 = vpack.c.bf16 %v221, %v221
        %v223 = vld [vmem:[%s1] sm:$0xf]
        %v224 = vld [vmem:[%s1 + $0x4] sm:$0xf]
        %v225 = vld [vmem:[%s1 + $0x8] sm:$0xf]
        %v226 = vld [vmem:[%s1 + $0xc] sm:$0xf]
        %v227 = vld [vmem:[%s2] sm:$0x1]
        %v229 = vlaneseq
        %v230 = vshrl.u32 %v229, 7
        %v231 = vsub.s32 0, %v230
        %v232 = vrot.slane %v227, %v231
        %v238 = vunpack.c.l.b16 %v223
        %v239 = vunpack.c.l.b16 %v224
        %v240 = vunpack.c.l.b16 %v225
        %v241 = vunpack.c.l.b16 %v226
        %v242 = vpack.c.b16 %v239, %v238
        %v243 = vpack.c.b16 %v241, %v240
        %vm246 = vcmask 261120
        %v248 = vsel %vm246, %v222, 0
        %250 = vmatprep.subr.bf16.mxu0 0
        %251 = vmatpush1.bf16.msra.mxu0 %v242
        %252 = vmatprep.subr.bf16.mxu0 0
        %253 = vmatpush1.bf16.msra.mxu0 %v243
        %254 = vmatprep.subr.bf16.mxu0 0
        %255 = vmatpush1.bf16.msra.mxu0 0
        %256 = vmatprep.subr.bf16.mxu0 0
        %257 = vmatpush1.bf16.msra.mxu0 0
        %258 = vmatprep.subr.bf16.mxu0 0
        %259 = vmatpush1.bf16.msra.mxu0 0
        %260 = vmatprep.subr.bf16.mxu0 0
        %261 = vmatpush1.bf16.msra.mxu0 0
        %262 = vmatprep.subr.bf16.mxu0 0
        %263 = vmatpush1.bf16.msra.mxu0 0
        %264 = vmatprep.subr.bf16.mxu0 0
        %265 = vmatpush1.bf16.msra.mxu0 0
        %266 = vmatprep.subr.bf16.mxu0 0
        %267 = vmatpush1.bf16.msra.mxu0 0
        %268 = vmatprep.subr.bf16.mxu0 0
        %269 = vmatpush1.bf16.msra.mxu0 0
        %270 = vmatprep.subr.bf16.mxu0 0
        %271 = vmatpush1.bf16.msra.mxu0 0
        %272 = vmatprep.subr.bf16.mxu0 0
        %273 = vmatpush1.bf16.msra.mxu0 0
        %274 = vmatprep.subr.bf16.mxu0 0
        %275 = vmatpush1.bf16.msra.mxu0 0
        %276 = vmatprep.subr.bf16.mxu0 0
        %277 = vmatpush1.bf16.msra.mxu0 0
        %278 = vmatprep.subr.bf16.mxu0 0
        %279 = vmatpush1.bf16.msra.mxu0 0
        %280 = vmatprep.subr.bf16.mxu0 0
        %281 = vmatpush1.bf16.msra.mxu0 0
        %282 = vmatprep.mubr.bf16.mxu0 0
        %283 = vmatmul.mubr.bf16.gmra.mrb[0].mxu0 %v248
        %v284 = vpop.f32.mrb[0].mxu0
        %v285 = vadd.f32 %v232, %v284
        %v286 = vpop.f32.mrb[0].mxu0
        %v287 = vpop.f32.mrb[0].mxu0
        %v288 = vpop.f32.mrb[0].mxu0
        %289 = vdwg.mxu0
        %v290 = vpack.c.bf16 %v285, %v285
        %v291 = vld [vmem:[%s3] sm:$0xf]
        %v292 = vld [vmem:[%s3 + $0x4] sm:$0xf]
        %v293 = vld [vmem:[%s3 + $0x8] sm:$0xf]
        %v294 = vld [vmem:[%s3 + $0xc] sm:$0xf]
        %v295 = vld [vmem:[%s3 + $0x10] sm:$0xf]
        %v296 = vld [vmem:[%s3 + $0x14] sm:$0xf]
        %v297 = vld [vmem:[%s3 + $0x18] sm:$0xf]
        %v298 = vld [vmem:[%s3 + $0x1c] sm:$0xf]
        %v299 = vld [vmem:[%s3 + $0x20] sm:$0xf]
        %v300 = vld [vmem:[%s3 + $0x24] sm:$0xf]
        %v301 = vld [vmem:[%s3 + $0x28] sm:$0xf]
        %v302 = vld [vmem:[%s3 + $0x2c] sm:$0xf]
        %v303 = vld [vmem:[%s3 + $0x30] sm:$0xf]
        %v304 = vld [vmem:[%s3 + $0x34] sm:$0xf]
        %v305 = vld [vmem:[%s3 + $0x38] sm:$0xf]
        %v306 = vld [vmem:[%s3 + $0x3c] sm:$0xf]
        %v307 = vld [vmem:[%s4] sm:$0x1]
        %v309 = vlaneseq
        %v310 = vshrl.u32 %v309, 7
        %v311 = vsub.s32 0, %v310
        %v312 = vrot.slane %v307, %v311
        %v330 = vunpack.c.l.b16 %v291
        %v331 = vunpack.c.l.b16 %v292
        %v332 = vunpack.c.l.b16 %v293
        %v333 = vunpack.c.l.b16 %v294
        %v334 = vunpack.c.l.b16 %v295
        %v335 = vunpack.c.l.b16 %v296
        %v336 = vunpack.c.l.b16 %v297
        %v337 = vunpack.c.l.b16 %v298
        %v338 = vunpack.c.l.b16 %v299
        %v339 = vunpack.c.l.b16 %v300
        %v340 = vunpack.c.l.b16 %v301
        %v341 = vunpack.c.l.b16 %v302
        %v342 = vunpack.c.l.b16 %v303
        %v343 = vunpack.c.l.b16 %v304
        %v344 = vunpack.c.l.b16 %v305
        %v345 = vunpack.c.l.b16 %v306
        %v346 = vpack.c.b16 %v331, %v330
        %v347 = vpack.c.b16 %v333, %v332
        %v348 = vpack.c.b16 %v335, %v334
        %v349 = vpack.c.b16 %v337, %v336
        %v350 = vpack.c.b16 %v339, %v338
        %v351 = vpack.c.b16 %v341, %v340
        %v352 = vpack.c.b16 %v343, %v342
        %v353 = vpack.c.b16 %v345, %v344
        %362 = vmatprep.subr.bf16.mxu0 0
        %363 = vmatpush1.bf16.msra.mxu0 %v346
        %364 = vmatprep.subr.bf16.mxu0 0
        %365 = vmatpush1.bf16.msra.mxu0 %v347
        %366 = vmatprep.subr.bf16.mxu0 0
        %367 = vmatpush1.bf16.msra.mxu0 %v348
        %368 = vmatprep.subr.bf16.mxu0 0
        %369 = vmatpush1.bf16.msra.mxu0 %v349
        %370 = vmatprep.subr.bf16.mxu0 0
        %371 = vmatpush1.bf16.msra.mxu0 %v350
        %372 = vmatprep.subr.bf16.mxu0 0
        %373 = vmatpush1.bf16.msra.mxu0 %v351
        %374 = vmatprep.subr.bf16.mxu0 0
        %375 = vmatpush1.bf16.msra.mxu0 %v352
        %376 = vmatprep.subr.bf16.mxu0 0
        %377 = vmatpush1.bf16.msra.mxu0 %v353
        %378 = vmatprep.subr.bf16.mxu0 0
        %379 = vmatpush1.bf16.msra.mxu0 0
        %380 = vmatprep.subr.bf16.mxu0 0
        %381 = vmatpush1.bf16.msra.mxu0 0
        %382 = vmatprep.subr.bf16.mxu0 0
        %383 = vmatpush1.bf16.msra.mxu0 0
        %384 = vmatprep.subr.bf16.mxu0 0
        %385 = vmatpush1.bf16.msra.mxu0 0
        %386 = vmatprep.subr.bf16.mxu0 0
        %387 = vmatpush1.bf16.msra.mxu0 0
        %388 = vmatprep.subr.bf16.mxu0 0
        %389 = vmatpush1.bf16.msra.mxu0 0
        %390 = vmatprep.subr.bf16.mxu0 0
        %391 = vmatpush1.bf16.msra.mxu0 0
        %392 = vmatprep.subr.bf16.mxu0 0
        %393 = vmatpush1.bf16.msra.mxu0 0
        %394 = vmatprep.mubr.bf16.mxu0 0
        %395 = vmatmul.mubr.bf16.gmra.mrb[0].mxu0 %v290
        %v396 = vpop.f32.mrb[0].mxu0
        %v397 = vadd.f32 %v312, %v396
        %v398 = vpop.f32.mrb[0].mxu0
        %v399 = vpop.f32.mrb[0].mxu0
        %v400 = vpop.f32.mrb[0].mxu0
        %401 = vdwg.mxu0
        %v402 = vpack.c.bf16 %v397, %v397
        %vm403 = vcmask 257024
        %404 = vst.msk [vmem:[%s215] sm:$0xf] %vm403, %v402
        %s405 = sand.u32 %s137, 1
        %s406 = scalar_lea.sflag [#allocation3], %s405
        %s407 = sand.u32 %s137, 1
        %s408 = smul.addr %s407, 4
        %s409 = scalar_lea.vmem [#allocation2], %s408
        // Predicated region
        $region41: #{tpu_custom_call.1} parent=39 // pred_check
          %p410 = pneg %p147
        $region42: #{tpu_custom_call.1} parent=39 // pred_check_branch
          %412 = sbr.rel (%p410) target = $region44
        $region43: #{tpu_custom_call.1} parent=39 // pred_region
          %s414 = ssub.s32 64, 64
          %415 = vsyncadd %s406, %s414
          %s416 = smul.addr %s19, 64
          %s417 = scalar_lea.hbm %s5, %s416
          %s419 = sshll.u32 %s409, 4
          %s420 = int_to_ptr.vmem [resolvable:$true] %s419
          %422 = dma.vmem_to_hbm [thread:$0]  %s420, 64, %s417, %s406
        $region44: #{tpu_custom_call.1} parent=39 // pred_fallthru
          _
      $region40: #{tpu_custom_call.1} parent=5 // pred_fallthru
        _
      %p423 = scmp.le.s32.totalorder 2, %s14
      // Predicated region
      $region45: #{tpu_custom_call.1} parent=5 // pred_check
        %p424 = pneg %p423
      $region46: #{tpu_custom_call.1} parent=5 // pred_check_branch
        %426 = sbr.rel (%p424) target = $region48
      $region47: #{tpu_custom_call.1} parent=5 // pred_region
        %s427 = ssub.s32 %s14, 2
        // Predicated region
        $region49: #{tpu_custom_call.1} parent=47 // pred_check
          %p428 = pneg %p153
        $region50: #{tpu_custom_call.1} parent=47 // pred_check_branch
          %430 = sbr.rel (%p428) target = $region52
        $region51: #{tpu_custom_call.1} parent=47 // pred_region
          %s431 = sand.u32 %s138, 1
          %s432 = scalar_lea.sflag [#allocation3], %s431
          %s433 = sand.u32 %s138, 1
          %s434 = smul.addr %s433, 4
          %s435 = scalar_lea.vmem [#allocation2], %s434
          %436 = dma.done %s432, 64
        $region52: #{tpu_custom_call.1} parent=47 // pred_fallthru
          _
      $region48: #{tpu_custom_call.1} parent=5 // pred_fallthru
        _
    $region6: #{tpu_custom_call.1} parent=1 // loop_footer
      %s18 = sadd.s32 1, %s14
    $region7: #{tpu_custom_call.1} parent=1 // loop_footer_branch
      %13 = sbr.rel target = $region3
    $region8: #{tpu_custom_call.1} parent=1 // loop_exit
      _
    %437 = vsyncpa [#allocation3], 1
    %s438 = scalar_lea.sflag [#allocation3], 1
    %439 = vsyncpa %s438, 1

</llo_original>
